<compile_context>
chip_gen: v5e
topology: v5e:2x2
jax: 0.10.0
libtpu: 0.0.40
codegen_flags: <defaults>
</compile_context>

<pallas_src>
import functools

import jax
import jax.numpy as jnp
from jax import lax
from jax.experimental import pallas as pl
from jax.experimental.pallas import tpu as pltpu  # noqa: F401  (TPU backend registration)

EPS = 1e-12   # matches torch default eps in l2normalize (absorbed into rsqrt guard)
LANE = 128


def fused_spectral_conv_kernel(w_ref, u_ref, b_ref, p_ref, y_ref, u_out_ref, v_out_ref):
    """Power iteration + sigma + lane-dense conv GEMM, all in one grid step.

    w_ref : (Cout, kpad)  weight, contraction dim zero-padded to 128 lanes (exact padding)
    u_ref : (1, Cout)     current u
    b_ref : (Cout, 1)     bias
    p_ref : (Mpad, kpad)  im2col patches, rows/cols zero-padded
    y_ref : (Cout, Mpad)  y^T (lane-dense output tile)
    """
    w = w_ref[...]                                                     # (Cout, kpad)
    u = u_ref[...]                                                     # (1, Cout)

    # ---- one power-iteration step on the tiny weight (zero-padded cols are exact) ----
    wu = jnp.dot(u, w, preferred_element_type=jnp.float32)             # (1, kpad) = u W
    v_new = wu * lax.rsqrt(jnp.maximum(jnp.sum(wu * wu), EPS * EPS))   # l2normalize
    # W v  without transposing w: contract both operands on the kpad axis ("NT" form).
    wv = lax.dot_general(v_new, w, (((1,), (1,)), ((), ())),
                         preferred_element_type=jnp.float32)           # (1, Cout)
    u_new = wv * lax.rsqrt(jnp.maximum(jnp.sum(wv * wv), EPS * EPS))   # l2normalize

    sigma = jnp.sum(u_new * wv)                                        # u_new . (W v_new)
    inv_sigma = 1.0 / sigma                                            # exact

    u_out_ref[...] = u_new
    v_out_ref[...] = v_new

    # ---- conv as GEMM with sigma scaling folded into the epilogue ----
    # (Cout, kpad) x (Mpad, kpad)^T -> (Cout, Mpad), output lane dim is Mpad (multiple of 128).
    yt = lax.dot_general(w, p_ref[...], (((1,), (1,)), ((), ())),
                         preferred_element_type=jnp.float32)
    y_ref[...] = (yt * inv_sigma + b_ref[...]).astype(y_ref.dtype)


def im2col_nchw(x, K, pad):
    """x: (N, C, H, W) -> patches (N*H*W, C*K*K), flattened (c, kh, kw) to match
    PyTorch's weight.view(out_ch, -1).  Fused XLA glue under jit."""
    N, C, H, W = x.shape
    xp = jnp.pad(x, ((0, 0), (0, 0), (pad, pad), (pad, pad)))
    cols = [xp[:, :, ki:ki + H, kj:kj + W] for ki in range(K) for kj in range(K)]
    pats = jnp.stack(cols, axis=2)                     # (N, C, K*K, H, W)
    pats = pats.transpose(0, 3, 4, 1, 2)               # (N, H, W, C, K*K)
    return pats.reshape(N * H * W, C * K * K)


@jax.jit
def spectral_norm_conv2d(x, weight, bias, u, v):
    """Forward of SpectralNorm(Conv2d).  x: NCHW float32.  Returns (y, u_new, v_new)."""
    del v  # stored v is overwritten before use when power_iterations >= 1
    N, C, H, W = x.shape
    Cout, Cin, K, _ = weight.shape
    width = Cin * K * K
    kpad = ((width + LANE - 1) // LANE) * LANE

    w_pad = jnp.pad(weight.reshape(Cout, width).astype(jnp.float32),
                    ((0, 0), (0, kpad - width)))                       # (Cout, kpad)
    u2d = u.reshape(1, Cout).astype(jnp.float32)
    b2d = bias.reshape(Cout, 1).astype(jnp.float32)

    # im2col in the wrapper (fused XLA producer).  TODO(synk): fuse into the kernel at scale.
    patches = im2col_nchw(x, K, pad=1)                                 # (M, width)
    M = patches.shape[0]
    m_pad = ((M + LANE - 1) // LANE) * LANE                            # lane-dense output, no ragged tile
    patches_pad = jnp.pad(patches, ((0, m_pad - M), (0, kpad - width)))  # (Mpad, kpad)

    yt, u_new, v_new_pad = pl.pallas_call(
        fused_spectral_conv_kernel,
        out_shape=(
            jax.ShapeDtypeStruct((Cout, m_pad), jnp.float32),
            jax.ShapeDtypeStruct((1, Cout), jnp.float32),
            jax.ShapeDtypeStruct((1, kpad), jnp.float32),
        ),
        grid=(1,),
        in_specs=[
            pl.BlockSpec((Cout, kpad), lambda i: (0, 0)),   # weight (resident)
            pl.BlockSpec((1, Cout), lambda i: (0, 0)),      # u
            pl.BlockSpec((Cout, 1), lambda i: (0, 0)),      # bias
            pl.BlockSpec((m_pad, kpad), lambda i: (0, 0)),  # patches (no wrapper transpose)
        ],
        out_specs=[
            pl.BlockSpec((Cout, m_pad), lambda i: (0, 0)),  # y^T, lane-dense
            pl.BlockSpec((1, Cout), lambda i: (0, 0)),
            pl.BlockSpec((1, kpad), lambda i: (0, 0)),
        ],
    )(w_pad, u2d, b2d, patches_pad)

    y = yt[:, :M].reshape(Cout, N, H, W).transpose(1, 0, 2, 3)         # back to NCHW
    return y, u_new.reshape(Cout), v_new_pad[0, :width]


def reference_forward(x, weight, bias, u, v):
    """Pure-JAX reference of the same math (sanity check)."""
    Cout, Cin, K, _ = weight.shape
    w2d = weight.reshape(Cout, -1)
    wu = w2d.T @ u
    v_new = wu / (jnp.linalg.norm(wu) + EPS)
    wv = w2d @ v_new
    u_new = wv / (jnp.linalg.norm(wv) + EPS)
    sigma = u_new @ (w2d @ v_new)
    w_sn = (w2d / sigma).reshape(weight.shape)
    y = lax.conv_general_dilated(
        x, w_sn, window_strides=(1, 1), padding=((1, 1), (1, 1)),
        dimension_numbers=("NCHW", "OIHW", "NCHW"))
    return y + bias.reshape(1, -1, 1, 1), u_new, v_new


if __name__ == "__main__":
    key = jax.random.PRNGKey(0)
    k_x, k_w, k_b, k_u, k_v = jax.random.split(key, 5)

    N, Cin, Hs, Ws = 2, 4, 16, 16
    Cout, K = 8, 3

    x = jax.random.normal(k_x, (N, Cin, Hs, Ws), dtype=jnp.float32)
    weight = jax.random.normal(k_w, (Cout, Cin, K, K), dtype=jnp.float32) * 0.1
    bias = jax.random.normal(k_b, (Cout,), dtype=jnp.float32) * 0.1

    # u, v buffers: randn then l2-normalized (as in _make_params)
    u0 = jax.random.normal(k_u, (Cout,), dtype=jnp.float32)
    v0 = jax.random.normal(k_v, (Cin * K * K,), dtype=jnp.float32)
    u0 = u0 / (jnp.linalg.norm(u0) + EPS)
    v0 = v0 / (jnp.linalg.norm(v0) + EPS)

    y, u_new, v_new = spectral_norm_conv2d(x, weight, bias, u0, v0)
    jax.block_until_ready((y, u_new, v_new))

    y_ref, u_ref, v_ref = reference_forward(x, weight, bias, u0, v0)
    assert y.shape == (N, Cout, Hs, Ws)
    assert jnp.allclose(y, y_ref, atol=1e-4, rtol=1e-4)
    assert jnp.allclose(u_new, u_ref, atol=1e-5, rtol=1e-5)
    assert jnp.allclose(v_new, v_ref, atol=1e-5, rtol=1e-5)

    print("KERNEL_OK")
</pallas_src>

<mosaic_0001>
module attributes {stable_mosaic.version = 11 : i64} {
  func.func @fused_spectral_conv_kernel(%arg0: i32, %arg1: memref<8x128xf32, #tpu.memory_space<vmem>>, %arg2: memref<1x8xf32, #tpu.memory_space<vmem>>, %arg3: memref<8x1xf32, #tpu.memory_space<vmem>>, %arg4: memref<512x128xf32, #tpu.memory_space<vmem>>, %arg5: memref<8x512xf32, #tpu.memory_space<vmem>>, %arg6: memref<1x8xf32, #tpu.memory_space<vmem>>, %arg7: memref<1x128xf32, #tpu.memory_space<vmem>>) attributes {dimension_semantics = [#tpu.dimension_semantics<arbitrary>], iteration_bounds = array<i64: 1>, scalar_prefetch = 0 : i64, scratch_operands = 0 : i64, tpu.core_type = #tpu.core_type<tc>, window_params = [{pipeline_mode = #tpu.pipeline_mode<synchronous>, transform_indices = @transform_0, window_bounds = array<i64: 8, 128>}, {pipeline_mode = #tpu.pipeline_mode<synchronous>, transform_indices = @transform_1, window_bounds = array<i64: 1, 8>}, {pipeline_mode = #tpu.pipeline_mode<synchronous>, transform_indices = @transform_2, window_bounds = array<i64: 8, 1>}, {pipeline_mode = #tpu.pipeline_mode<synchronous>, transform_indices = @transform_3, window_bounds = array<i64: 512, 128>}, {pipeline_mode = #tpu.pipeline_mode<synchronous>, transform_indices = @transform_4, window_bounds = array<i64: 8, 512>}, {pipeline_mode = #tpu.pipeline_mode<synchronous>, transform_indices = @transform_5, window_bounds = array<i64: 1, 8>}, {pipeline_mode = #tpu.pipeline_mode<synchronous>, transform_indices = @transform_6, window_bounds = array<i64: 1, 128>}]} {
    %c0 = arith.constant 0 : index
    %c0_0 = arith.constant 0 : index
    %0 = vector.load %arg1[%c0, %c0_0] : memref<8x128xf32, #tpu.memory_space<vmem>>, vector<8x128xf32>
    %c0_1 = arith.constant 0 : index
    %c0_2 = arith.constant 0 : index
    %1 = vector.load %arg2[%c0_1, %c0_2] : memref<1x8xf32, #tpu.memory_space<vmem>>, vector<1x8xf32>
    %cst = arith.constant dense<0.000000e+00> : vector<1x128xf32>
    %2 = tpu.matmul %1, %0, %cst {dimension_numbers = #tpu.dot_dimension_numbers<[1], [0], [0], [1], [0, 0, 1, 1], [], []>} : vector<1x8xf32>, vector<8x128xf32>, vector<1x128xf32> -> vector<1x128xf32>
    %3 = arith.mulf %2, %2 : vector<1x128xf32>
    %4 = vector.shape_cast %3 : vector<1x128xf32> to vector<1x1x128xf32>
    %cst_3 = arith.constant dense<0.000000e+00> : vector<1xf32>
    %5 = vector.multi_reduction <add>, %4, %cst_3 [1, 2] : vector<1x1x128xf32> to vector<1xf32>
    %6 = vector.shape_cast %5 : vector<1xf32> to vector<1x1x1xf32>
    %7 = vector.extract %6[0, 0, 0] : f32 from vector<1x1x1xf32>
    %cst_4 = arith.constant 1.000000e-24 : f32
    %8 = arith.maximumf %7, %cst_4 : f32
    %9 = math.rsqrt %8 : f32
    %10 = vector.broadcast %9 : f32 to vector<1x128xf32>
    %11 = arith.mulf %2, %10 : vector<1x128xf32>
    %cst_5 = arith.constant dense<0.000000e+00> : vector<1x8xf32>
    %12 = tpu.matmul %11, %0, %cst_5 {dimension_numbers = #tpu.dot_dimension_numbers<[1], [1], [0], [0], [0, 0, 1, 0], [], []>} : vector<1x128xf32>, vector<8x128xf32>, vector<1x8xf32> -> vector<1x8xf32>
    %13 = arith.mulf %12, %12 : vector<1x8xf32>
    %14 = vector.shape_cast %13 : vector<1x8xf32> to vector<1x1x8xf32>
    %cst_6 = arith.constant dense<0.000000e+00> : vector<1xf32>
    %15 = vector.multi_reduction <add>, %14, %cst_6 [1, 2] : vector<1x1x8xf32> to vector<1xf32>
    %16 = vector.shape_cast %15 : vector<1xf32> to vector<1x1x1xf32>
    %17 = vector.extract %16[0, 0, 0] : f32 from vector<1x1x1xf32>
    %cst_7 = arith.constant 1.000000e-24 : f32
    %18 = arith.maximumf %17, %cst_7 : f32
    %19 = math.rsqrt %18 : f32
    %20 = vector.broadcast %19 : f32 to vector<1x8xf32>
    %21 = arith.mulf %12, %20 : vector<1x8xf32>
    %22 = arith.mulf %21, %12 : vector<1x8xf32>
    %23 = vector.shape_cast %22 : vector<1x8xf32> to vector<1x1x8xf32>
    %cst_8 = arith.constant dense<0.000000e+00> : vector<1xf32>
    %24 = vector.multi_reduction <add>, %23, %cst_8 [1, 2] : vector<1x1x8xf32> to vector<1xf32>
    %25 = vector.shape_cast %24 : vector<1xf32> to vector<1x1x1xf32>
    %26 = vector.extract %25[0, 0, 0] : f32 from vector<1x1x1xf32>
    %cst_9 = arith.constant 1.000000e+00 : f32
    %27 = arith.divf %cst_9, %26 : f32
    %c0_10 = arith.constant 0 : index
    %c0_11 = arith.constant 0 : index
    %28 = vector.load %arg6[%c0_10, %c0_11] : memref<1x8xf32, #tpu.memory_space<vmem>>, vector<1x8xf32>
    tpu.vector_store %arg6[%c0_10, %c0_11], %21 {strides = array<i32>} : memref<1x8xf32, #tpu.memory_space<vmem>>, vector<1x8xf32>,
    %c0_12 = arith.constant 0 : index
    %c0_13 = arith.constant 0 : index
    %29 = vector.load %arg7[%c0_12, %c0_13] : memref<1x128xf32, #tpu.memory_space<vmem>>, vector<1x128xf32>
    tpu.vector_store %arg7[%c0_12, %c0_13], %11 {strides = array<i32>} : memref<1x128xf32, #tpu.memory_space<vmem>>, vector<1x128xf32>,
    %c0_14 = arith.constant 0 : index
    %c0_15 = arith.constant 0 : index
    %30 = vector.load %arg4[%c0_14, %c0_15] : memref<512x128xf32, #tpu.memory_space<vmem>>, vector<512x128xf32>
    %cst_16 = arith.constant dense<0.000000e+00> : vector<8x512xf32>
    %31 = tpu.matmul %0, %30, %cst_16 {dimension_numbers = #tpu.dot_dimension_numbers<[1], [1], [0], [0], [0, 0, 1, 0], [], []>} : vector<8x128xf32>, vector<512x128xf32>, vector<8x512xf32> -> vector<8x512xf32>
    %32 = vector.broadcast %27 : f32 to vector<8x512xf32>
    %33 = arith.mulf %31, %32 : vector<8x512xf32>
    %c0_17 = arith.constant 0 : index
    %c0_18 = arith.constant 0 : index
    %34 = vector.load %arg3[%c0_17, %c0_18] : memref<8x1xf32, #tpu.memory_space<vmem>>, vector<8x1xf32>
    %35 = vector.broadcast %34 : vector<8x1xf32> to vector<8x512xf32>
    %36 = arith.addf %33, %35 : vector<8x512xf32>
    %c0_19 = arith.constant 0 : index
    %c0_20 = arith.constant 0 : index
    %37 = vector.load %arg5[%c0_19, %c0_20] : memref<8x512xf32, #tpu.memory_space<vmem>>, vector<8x512xf32>
    tpu.vector_store %arg5[%c0_19, %c0_20], %36 {strides = array<i32>} : memref<8x512xf32, #tpu.memory_space<vmem>>, vector<8x512xf32>,
    return
  }
  func.func @transform_0(%arg0: i32) -> (i32, i32) {
    %c0_i32 = arith.constant 0 : i32
    %c0_i32_0 = arith.constant 0 : i32
    %c0_i32_1 = arith.constant 0 : i32
    return %c0_i32, %c0_i32_0 : i32, i32
  }
  func.func @transform_1(%arg0: i32) -> (i32, i32) {
    %c0_i32 = arith.constant 0 : i32
    %c0_i32_0 = arith.constant 0 : i32
    %c0_i32_1 = arith.constant 0 : i32
    return %c0_i32, %c0_i32_0 : i32, i32
  }
  func.func @transform_2(%arg0: i32) -> (i32, i32) {
    %c0_i32 = arith.constant 0 : i32
    %c0_i32_0 = arith.constant 0 : i32
    %c0_i32_1 = arith.constant 0 : i32
    return %c0_i32, %c0_i32_0 : i32, i32
  }
  func.func @transform_3(%arg0: i32) -> (i32, i32) {
    %c0_i32 = arith.constant 0 : i32
    %c0_i32_0 = arith.constant 0 : i32
    %c0_i32_1 = arith.constant 0 : i32
    return %c0_i32, %c0_i32_0 : i32, i32
  }
  func.func @transform_4(%arg0: i32) -> (i32, i32) {
    %c0_i32 = arith.constant 0 : i32
    %c0_i32_0 = arith.constant 0 : i32
    %c0_i32_1 = arith.constant 0 : i32
    return %c0_i32, %c0_i32_0 : i32, i32
  }
  func.func @transform_5(%arg0: i32) -> (i32, i32) {
    %c0_i32 = arith.constant 0 : i32
    %c0_i32_0 = arith.constant 0 : i32
    %c0_i32_1 = arith.constant 0 : i32
    return %c0_i32, %c0_i32_0 : i32, i32
  }
  func.func @transform_6(%arg0: i32) -> (i32, i32) {
    %c0_i32 = arith.constant 0 : i32
    %c0_i32_0 = arith.constant 0 : i32
    %c0_i32_1 = arith.constant 0 : i32
    return %c0_i32, %c0_i32_0 : i32, i32
  }
}

</mosaic_0001>

<llo_original>
// kernel: spectral_norm_conv2d.1
$region0: #{spectral_norm_conv2d.1}
  #allocation0 [shape = 'u32[]', space=smem, size = 0x4, offset = 0x4, fixed_abs, tag = 'smem constant byte address 0x4 - core index']
  #allocation1 [shape = 'u32[72,128]{1,0:T(1,128)}', space=vmem, size = 0x9000, scoped, tag = 'internal scratch']
  %s0 = inlined_call_operand.vmem [shape: f32[8,128], index: 0, kind: input, shape index: {}]
  %s1 = inlined_call_operand.vmem [shape: f32[1,8], index: 1, kind: input, shape index: {}]
  %s2 = inlined_call_operand.vmem [shape: f32[8,1], index: 2, kind: input, shape index: {}]
  %s3 = inlined_call_operand.vmem [shape: f32[512,128], index: 3, kind: input, shape index: {}]
  %s4 = inlined_call_operand.vmem [shape: f32[8,512], index: 4, kind: output, shape index: {0}]
  %s5 = inlined_call_operand.hbm [shape: f32[1,8], index: 5, kind: output, shape index: {1}]
  %s6 = inlined_call_operand.vmem [shape: f32[1,128], index: 6, kind: output, shape index: {2}]
  %7 = xla_tuple %s4, %s5, %s6
  %s8 = sld [smem:[#allocation0]]
  $region42: #{spectral_norm_conv2d.1} parent=0
    _
  %s10 = ssub.s32 1, %s8
  %s11 = scalar_select 0, %s10, %s8
  $region1: #{spectral_norm_conv2d.1} parent=0
    #allocation2 [shape = 'u8[512]{0}', space=vmem, size = 0x400, scoped, tag = 'output window, operand 1, single buffered']
    #allocation3 [shape = 's32[1]{0}', space=sflag, size = 0x4, scoped, tag = 'scoped memory for spectral_norm_conv2d.1']
    %12 = vsyncpa [#allocation3], 0
    // Predicated region
    $region2: #{spectral_norm_conv2d.1} parent=1 // pred_check
      _
    $region3: #{spectral_norm_conv2d.1} parent=1 // pred_check_branch
      %14 = sbr.rel (0) target = $region5
    $region4: #{spectral_norm_conv2d.1} parent=1 // pred_region
      _
    $region5: #{spectral_norm_conv2d.1} parent=1 // pred_fallthru
      _
    // Predicated region
    $region6: #{spectral_norm_conv2d.1} parent=1 // pred_check
      _
    $region7: #{spectral_norm_conv2d.1} parent=1 // pred_check_branch
      %16 = sbr.rel (0) target = $region9
    $region8: #{spectral_norm_conv2d.1} parent=1 // pred_region
      _
    $region9: #{spectral_norm_conv2d.1} parent=1 // pred_fallthru
      _
    // Predicated region
    $region10: #{spectral_norm_conv2d.1} parent=1 // pred_check
      _
    $region11: #{spectral_norm_conv2d.1} parent=1 // pred_check_branch
      %18 = sbr.rel (0) target = $region13
    $region12: #{spectral_norm_conv2d.1} parent=1 // pred_region
      _
    $region13: #{spectral_norm_conv2d.1} parent=1 // pred_fallthru
      _
    // Predicated region
    $region14: #{spectral_norm_conv2d.1} parent=1 // pred_check
      _
    $region15: #{spectral_norm_conv2d.1} parent=1 // pred_check_branch
      %20 = sbr.rel (0) target = $region17
    $region16: #{spectral_norm_conv2d.1} parent=1 // pred_region
      _
    $region17: #{spectral_norm_conv2d.1} parent=1 // pred_fallthru
      _
    %v21 = vld [vmem:[%s0] sm:$0xff]
    %v22 = vld [vmem:[%s1] sm:$0x1]
    %vm23 = vcmask 64512
    %v25 = vsel %vm23, %v22, 0
    %27 = vmatpush.msra.mxu0 0.0
    %28 = vmatpush.msra.mxu0 0.0
    %29 = vmatpush.msra.mxu0 0.0
    %30 = vmatpush.msra.mxu0 0.0
    %31 = vmatpush.msra.mxu0 0.0
    %32 = vmatpush.msra.mxu0 0.0
    %33 = vmatpush.msra.mxu0 0.0
    %34 = vmatpush.msra.mxu0 0.0
    %35 = vmatpush.msra.mxu0 0.0
    %36 = vmatpush.msra.mxu0 0.0
    %37 = vmatpush.msra.mxu0 0.0
    %38 = vmatpush.msra.mxu0 0.0
    %39 = vmatpush.msra.mxu0 0.0
    %40 = vmatpush.msra.mxu0 0.0
    %41 = vmatpush.msra.mxu0 0.0
    %42 = vmatpush.msra.mxu0 %v21
    %43 = vmatmul.f32.gmra.mxu0 %v25
    %v44 = vpop.f32.mrf.mxu0
    %v45 = vadd.f32 0.0, %v44
    %46 = vdwg.mxu0
    %v47 = vmul.f32 %v45, %v45
    %vm48 = vcmask 1040384
    %v49 = vsel %vm48, %v47, 0.0
    %50 = vadd.xlane.f32.xlu0 %v49
    %v51 = vpop.xlane.xlu0 %50
    %v52 = vrot.slane %v51, 4
    %v53 = vadd.f32 %v51, %v52
    %v54 = vrot.slane %v53, 2
    %v55 = vadd.f32 %v53, %v54
    %v56 = vrot.slane %v55, 1
    %v57 = vadd.f32 %v55, %v56
    %s58 = vtos %v57
    %s59 = smax.f32 %s58, 1e-24
    %v60 = vstv %s59
    %v61 = vrsqrt.pop %v60
    %v62 = vmul.f32 %v61, %v60
    %v63 = vmul.f32 %v62, %v61
    %v64 = vmul.f32 0.5, %v63
    %v65 = vsub.f32 1.5, %v64
    %v66 = vmul.f32 %v61, %v65
    %vm67 = vweird.f32 %v60
    %vm68 = vweird.f32 %v61
    %vm69 = vmor %vm67, %vm68
    %v70 = vsel %vm69, %v61, %v66
    %s71 = vtos %v70
    %v72 = vstv %s71
    %v73 = vmul.f32 %v45, %v72
    %74 = vmatpush.xpose.msra.mxu0 0.0
    %75 = vmatpush.xpose.msra.mxu0 0.0
    %76 = vmatpush.xpose.msra.mxu0 0.0
    %77 = vmatpush.xpose.msra.mxu0 0.0
    %78 = vmatpush.xpose.msra.mxu0 0.0
    %79 = vmatpush.xpose.msra.mxu0 0.0
    %80 = vmatpush.xpose.msra.mxu0 0.0
    %81 = vmatpush.xpose.msra.mxu0 0.0
    %82 = vmatpush.xpose.msra.mxu0 0.0
    %83 = vmatpush.xpose.msra.mxu0 0.0
    %84 = vmatpush.xpose.msra.mxu0 0.0
    %85 = vmatpush.xpose.msra.mxu0 0.0
    %86 = vmatpush.xpose.msra.mxu0 0.0
    %87 = vmatpush.xpose.msra.mxu0 0.0
    %88 = vmatpush.xpose.msra.mxu0 0.0
    %89 = vmatpush.xpose.msra.mxu0 %v21
    %90 = vmatmul.f32.gmra.mxu0 %v73
    %v91 = vpop.f32.mrf.mxu0
    %v92 = vadd.f32 0.0, %v91
    %93 = vdwg.mxu0
    %v94 = vmul.f32 %v92, %v92
    %vm95 = vcmask 57344
    %v96 = vsel %vm95, %v94, 0.0
    %97 = vadd.xlane.f32.xlu0 %v96
    %v98 = vpop.xlane.xlu0 %97
    %v99 = vrot.slane %v98, 4
    %v100 = vadd.f32 %v98, %v99
    %v101 = vrot.slane %v100, 2
    %v102 = vadd.f32 %v100, %v101
    %v103 = vrot.slane %v102, 1
    %v104 = vadd.f32 %v102, %v103
    %s105 = vtos %v104
    %s106 = smax.f32 %s105, 1e-24
    %v107 = vstv %s106
    %v108 = vrsqrt.pop %v107
    %v109 = vmul.f32 %v108, %v107
    %v110 = vmul.f32 %v109, %v108
    %v111 = vmul.f32 0.5, %v110
    %v112 = vsub.f32 1.5, %v111
    %v113 = vmul.f32 %v108, %v112
    %vm114 = vweird.f32 %v107
    %vm115 = vweird.f32 %v108
    %vm116 = vmor %vm114, %vm115
    %v117 = vsel %vm116, %v108, %v113
    %s118 = vtos %v117
    %v119 = vstv %s118
    %v120 = vmul.f32 %v92, %v119
    %v121 = vmul.f32 %v120, %v92
    %v122 = vsel %vm95, %v121, 0.0
    %123 = vadd.xlane.f32.xlu0 %v122
    %v124 = vpop.xlane.xlu0 %123
    %v125 = vrot.slane %v124, 4
    %v126 = vadd.f32 %v124, %v125
    %v127 = vrot.slane %v126, 2
    %v128 = vadd.f32 %v126, %v127
    %v129 = vrot.slane %v128, 1
    %v130 = vadd.f32 %v128, %v129
    %s131 = vtos %v130
    %v132 = vstv %s131
    %v133 = vrcp.pop %v132
    %v134 = vmul.f32 %v132, %v133
    %v135 = vsub.f32 1.0, %v134
    %v136 = vmul.f32 %v133, %v135
    %v137 = vadd.f32 %v133, %v136
    %vm138 = vweird.f32 %v132
    %vm139 = vweird.f32 %v133
    %vm140 = vmor %vm138, %vm139
    %v141 = vsel %vm140, %v133, %v137
    %v142 = vand.u32 2147483647, %v132
    %vm143 = vcmp.eq.f32.partialorder %v142, 8.507059e+37
    %v144 = vand.u32 %v132, 2147483648
    %v145 = vor.u32 1.1754944e-38, %v144
    %v146 = vsel %vm143, %v145, %v141
    %s147 = vtos %v146
    %148 = vst.msk [vmem:[#allocation2] sm:$0x1] %vm95, %v120
    %149 = vst [vmem:[%s6] sm:$0x1] %v73
    %v150 = vld [vmem:[%s3] sm:$0xff]
    %v151 = vld [vmem:[%s3 + $0x8] sm:$0xff]
    %v152 = vld [vmem:[%s3 + $0x10] sm:$0xff]
    %v153 = vld [vmem:[%s3 + $0x18] sm:$0xff]
    %v154 = vld [vmem:[%s3 + $0x20] sm:$0xff]
    %v155 = vld [vmem:[%s3 + $0x28] sm:$0xff]
    %v156 = vld [vmem:[%s3 + $0x30] sm:$0xff]
    %v157 = vld [vmem:[%s3 + $0x38] sm:$0xff]
    %v158 = vld [vmem:[%s3 + $0x40] sm:$0xff]
    %v159 = vld [vmem:[%s3 + $0x48] sm:$0xff]
    %v160 = vld [vmem:[%s3 + $0x50] sm:$0xff]
    %v161 = vld [vmem:[%s3 + $0x58] sm:$0xff]
    %v162 = vld [vmem:[%s3 + $0x60] sm:$0xff]
    %v163 = vld [vmem:[%s3 + $0x68] sm:$0xff]
    %v164 = vld [vmem:[%s3 + $0x70] sm:$0xff]
    %v165 = vld [vmem:[%s3 + $0x78] sm:$0xff]
    %v166 = vld [vmem:[%s3 + $0x80] sm:$0xff]
    %v167 = vld [vmem:[%s3 + $0x88] sm:$0xff]
    %v168 = vld [vmem:[%s3 + $0x90] sm:$0xff]
    %v169 = vld [vmem:[%s3 + $0x98] sm:$0xff]
    %v170 = vld [vmem:[%s3 + $0xa0] sm:$0xff]
    %v171 = vld [vmem:[%s3 + $0xa8] sm:$0xff]
    %v172 = vld [vmem:[%s3 + $0xb0] sm:$0xff]
    %v173 = vld [vmem:[%s3 + $0xb8] sm:$0xff]
    %v174 = vld [vmem:[%s3 + $0xc0] sm:$0xff]
    %v175 = vld [vmem:[%s3 + $0xc8] sm:$0xff]
    %v176 = vld [vmem:[%s3 + $0xd0] sm:$0xff]
    %v177 = vld [vmem:[%s3 + $0xd8] sm:$0xff]
    %v178 = vld [vmem:[%s3 + $0xe0] sm:$0xff]
    %v179 = vld [vmem:[%s3 + $0xe8] sm:$0xff]
    %v180 = vld [vmem:[%s3 + $0xf0] sm:$0xff]
    %v181 = vld [vmem:[%s3 + $0xf8] sm:$0xff]
    %v182 = vld [vmem:[%s3 + $0x100] sm:$0xff]
    %v183 = vld [vmem:[%s3 + $0x108] sm:$0xff]
    %v184 = vld [vmem:[%s3 + $0x110] sm:$0xff]
    %v185 = vld [vmem:[%s3 + $0x118] sm:$0xff]
    %v186 = vld [vmem:[%s3 + $0x120] sm:$0xff]
    %v187 = vld [vmem:[%s3 + $0x128] sm:$0xff]
    %v188 = vld [vmem:[%s3 + $0x130] sm:$0xff]
    %v189 = vld [vmem:[%s3 + $0x138] sm:$0xff]
    %v190 = vld [vmem:[%s3 + $0x140] sm:$0xff]
    %v191 = vld [vmem:[%s3 + $0x148] sm:$0xff]
    %v192 = vld [vmem:[%s3 + $0x150] sm:$0xff]
    %v193 = vld [vmem:[%s3 + $0x158] sm:$0xff]
    %v194 = vld [vmem:[%s3 + $0x160] sm:$0xff]
    %v195 = vld [vmem:[%s3 + $0x168] sm:$0xff]
    %v196 = vld [vmem:[%s3 + $0x170] sm:$0xff]
    %v197 = vld [vmem:[%s3 + $0x178] sm:$0xff]
    %v198 = vld [vmem:[%s3 + $0x180] sm:$0xff]
    %v199 = vld [vmem:[%s3 + $0x188] sm:$0xff]
    %v200 = vld [vmem:[%s3 + $0x190] sm:$0xff]
    %v201 = vld [vmem:[%s3 + $0x198] sm:$0xff]
    %v202 = vld [vmem:[%s3 + $0x1a0] sm:$0xff]
    %v203 = vld [vmem:[%s3 + $0x1a8] sm:$0xff]
    %v204 = vld [vmem:[%s3 + $0x1b0] sm:$0xff]
    %v205 = vld [vmem:[%s3 + $0x1b8] sm:$0xff]
    %v206 = vld [vmem:[%s3 + $0x1c0] sm:$0xff]
    %v207 = vld [vmem:[%s3 + $0x1c8] sm:$0xff]
    %v208 = vld [vmem:[%s3 + $0x1d0] sm:$0xff]
    %v209 = vld [vmem:[%s3 + $0x1d8] sm:$0xff]
    %v210 = vld [vmem:[%s3 + $0x1e0] sm:$0xff]
    %v211 = vld [vmem:[%s3 + $0x1e8] sm:$0xff]
    %v212 = vld [vmem:[%s3 + $0x1f0] sm:$0xff]
    %v213 = vld [vmem:[%s3 + $0x1f8] sm:$0xff]
    %214 = vmatpush.xpose.msra.mxu0 %v165
    %215 = vmatpush.xpose.msra.mxu0 %v164
    %216 = vmatpush.xpose.msra.mxu0 %v163
    %217 = vmatpush.xpose.msra.mxu0 %v162
    %218 = vmatpush.xpose.msra.mxu0 %v161
    %219 = vmatpush.xpose.msra.mxu0 %v160
    %220 = vmatpush.xpose.msra.mxu0 %v159
    %221 = vmatpush.xpose.msra.mxu0 %v158
    %222 = vmatpush.xpose.msra.mxu0 %v157
    %223 = vmatpush.xpose.msra.mxu0 %v156
    %224 = vmatpush.xpose.msra.mxu0 %v155
    %225 = vmatpush.xpose.msra.mxu0 %v154
    %226 = vmatpush.xpose.msra.mxu0 %v153
    %227 = vmatpush.xpose.msra.mxu0 %v152
    %228 = vmatpush.xpose.msra.mxu0 %v151
    %229 = vmatpush.xpose.msra.mxu0 %v150
    %230 = vmatmul.f32.gmra.mxu0 %v21
    %v231 = vpop.f32.mrf.mxu0
    %v232 = vadd.f32 0.0, %v231
    %233 = vdwg.mxu0
    %234 = vmatpush.xpose.msra.mxu0 %v181
    %235 = vmatpush.xpose.msra.mxu0 %v180
    %236 = vmatpush.xpose.msra.mxu0 %v179
    %237 = vmatpush.xpose.msra.mxu0 %v178
    %238 = vmatpush.xpose.msra.mxu0 %v177
    %239 = vmatpush.xpose.msra.mxu0 %v176
    %240 = vmatpush.xpose.msra.mxu0 %v175
    %241 = vmatpush.xpose.msra.mxu0 %v174
    %242 = vmatpush.xpose.msra.mxu0 %v173
    %243 = vmatpush.xpose.msra.mxu0 %v172
    %244 = vmatpush.xpose.msra.mxu0 %v171
    %245 = vmatpush.xpose.msra.mxu0 %v170
    %246 = vmatpush.xpose.msra.mxu0 %v169
    %247 = vmatpush.xpose.msra.mxu0 %v168
    %248 = vmatpush.xpose.msra.mxu0 %v167
    %249 = vmatpush.xpose.msra.mxu0 %v166
    %250 = vmatmul.f32.gmra.mxu0 %v21
    %v251 = vpop.f32.mrf.mxu0
    %v252 = vadd.f32 0.0, %v251
    %253 = vdwg.mxu0
    %254 = vmatpush.xpose.msra.mxu0 %v197
    %255 = vmatpush.xpose.msra.mxu0 %v196
    %256 = vmatpush.xpose.msra.mxu0 %v195
    %257 = vmatpush.xpose.msra.mxu0 %v194
    %258 = vmatpush.xpose.msra.mxu0 %v193
    %259 = vmatpush.xpose.msra.mxu0 %v192
    %260 = vmatpush.xpose.msra.mxu0 %v191
    %261 = vmatpush.xpose.msra.mxu0 %v190
    %262 = vmatpush.xpose.msra.mxu0 %v189
    %263 = vmatpush.xpose.msra.mxu0 %v188
    %264 = vmatpush.xpose.msra.mxu0 %v187
    %265 = vmatpush.xpose.msra.mxu0 %v186
    %266 = vmatpush.xpose.msra.mxu0 %v185
    %267 = vmatpush.xpose.msra.mxu0 %v184
    %268 = vmatpush.xpose.msra.mxu0 %v183
    %269 = vmatpush.xpose.msra.mxu0 %v182
    %270 = vmatmul.f32.gmra.mxu0 %v21
    %v271 = vpop.f32.mrf.mxu0
    %v272 = vadd.f32 0.0, %v271
    %273 = vdwg.mxu0
    %274 = vmatpush.xpose.msra.mxu0 %v213
    %275 = vmatpush.xpose.msra.mxu0 %v212
    %276 = vmatpush.xpose.msra.mxu0 %v211
    %277 = vmatpush.xpose.msra.mxu0 %v210
    %278 = vmatpush.xpose.msra.mxu0 %v209
    %279 = vmatpush.xpose.msra.mxu0 %v208
    %280 = vmatpush.xpose.msra.mxu0 %v207
    %281 = vmatpush.xpose.msra.mxu0 %v206
    %282 = vmatpush.xpose.msra.mxu0 %v205
    %283 = vmatpush.xpose.msra.mxu0 %v204
    %284 = vmatpush.xpose.msra.mxu0 %v203
    %285 = vmatpush.xpose.msra.mxu0 %v202
    %286 = vmatpush.xpose.msra.mxu0 %v201
    %287 = vmatpush.xpose.msra.mxu0 %v200
    %288 = vmatpush.xpose.msra.mxu0 %v199
    %289 = vmatpush.xpose.msra.mxu0 %v198
    %290 = vmatmul.f32.gmra.mxu0 %v21
    %v291 = vpop.f32.mrf.mxu0
    %v292 = vadd.f32 0.0, %v291
    %293 = vdwg.mxu0
    %v294 = vstv %s147
    %v295 = vmul.f32 %v232, %v294
    %v296 = vmul.f32 %v252, %v294
    %v297 = vmul.f32 %v272, %v294
    %v298 = vmul.f32 %v292, %v294
    %v299 = vld [vmem:[%s2] sm:$0xff]
    %301 = vset.pattern.permute.xlu0 0
    %302 = vperm.xlu0 %301, %v299
    %v303 = vpop.permute.xlu0 %302
    %v305 = vadd.f32 %v295, %v303
    %v306 = vadd.f32 %v296, %v303
    %v307 = vadd.f32 %v297, %v303
    %v308 = vadd.f32 %v298, %v303
    %309 = vst [vmem:[%s4] sm:$0xff] %v305
    %310 = vst [vmem:[%s4 + $0x8] sm:$0xff] %v306
    %311 = vst [vmem:[%s4 + $0x10] sm:$0xff] %v307
    %312 = vst [vmem:[%s4 + $0x18] sm:$0xff] %v308
    // Predicated region
    $region18: #{spectral_norm_conv2d.1} parent=1 // pred_check
      _
    $region19: #{spectral_norm_conv2d.1} parent=1 // pred_check_branch
      %314 = sbr.rel (0) target = $region21
    $region20: #{spectral_norm_conv2d.1} parent=1 // pred_region
      _
    $region21: #{spectral_norm_conv2d.1} parent=1 // pred_fallthru
      _
    // Predicated region
    $region22: #{spectral_norm_conv2d.1} parent=1 // pred_check
      _
    $region23: #{spectral_norm_conv2d.1} parent=1 // pred_check_branch
      %316 = sbr.rel (0) target = $region25
    $region24: #{spectral_norm_conv2d.1} parent=1 // pred_region
      %318 = vsyncadd [#allocation3], 0
      %s320 = sshll.u32 [#allocation2], 4
      %s321 = int_to_ptr.vmem [resolvable:$true] %s320
      %s322 = sshll.u32 %s5, 4
      %s323 = int_to_ptr.hbm [resolvable:$true] %s322
      %325 = dma.vmem_to_hbm [thread:$0]  %s321, 16, %s323, [#allocation3]
    $region25: #{spectral_norm_conv2d.1} parent=1 // pred_fallthru
      _
    // Predicated region
    $region26: #{spectral_norm_conv2d.1} parent=1 // pred_check
      _
    $region27: #{spectral_norm_conv2d.1} parent=1 // pred_check_branch
      %327 = sbr.rel (0) target = $region29
    $region28: #{spectral_norm_conv2d.1} parent=1 // pred_region
      _
    $region29: #{spectral_norm_conv2d.1} parent=1 // pred_fallthru
      _
    // Predicated region
    $region30: #{spectral_norm_conv2d.1} parent=1 // pred_check
      _
    $region31: #{spectral_norm_conv2d.1} parent=1 // pred_check_branch
      %329 = sbr.rel (0) target = $region33
    $region32: #{spectral_norm_conv2d.1} parent=1 // pred_region
      _
    $region33: #{spectral_norm_conv2d.1} parent=1 // pred_fallthru
      _
    // Predicated region
    $region34: #{spectral_norm_conv2d.1} parent=1 // pred_check
      _
    $region35: #{spectral_norm_conv2d.1} parent=1 // pred_check_branch
      %331 = sbr.rel (0) target = $region37
    $region36: #{spectral_norm_conv2d.1} parent=1 // pred_region
      %333 = dma.done [#allocation3], 16
    $region37: #{spectral_norm_conv2d.1} parent=1 // pred_fallthru
      _
    // Predicated region
    $region38: #{spectral_norm_conv2d.1} parent=1 // pred_check
      _
    $region39: #{spectral_norm_conv2d.1} parent=1 // pred_check_branch
      %335 = sbr.rel (0) target = $region41
    $region40: #{spectral_norm_conv2d.1} parent=1 // pred_region
      _
    $region41: #{spectral_norm_conv2d.1} parent=1 // pred_fallthru
      _
    %336 = vsyncpa [#allocation3], 1

</llo_original>
